<compile_context>
chip_gen: v5e
topology: v5e:2x2
jax: 0.10.0
libtpu: 0.0.40
codegen_flags: <defaults>
</compile_context>

<pallas_src>
import jax
import jax.numpy as jnp
from jax.experimental import pallas as pl
from jax.experimental.pallas import tpu as pltpu


# ----------------------------------------------------------------------------
# Kernels
# ----------------------------------------------------------------------------
def _mlp(x_f32, w1_bf16, b1_f32, w2_bf16, b2_f32):
    """relu(x @ W1 + b1) @ W2 + b2 with bf16 MXU operands, f32 accumulation."""
    h = jnp.dot(x_f32.astype(jnp.bfloat16), w1_bf16,
                preferred_element_type=jnp.float32)
    h = jnp.maximum(h + b1_f32, 0.0)            # b1 is (1, hidden) -> broadcasts
    y = jnp.dot(h.astype(jnp.bfloat16), w2_bf16,
                preferred_element_type=jnp.float32)
    return y + b2_f32


def _triplet_kernel(a_ref, p_ref, n_ref,
                    w1_ref, b1_ref, w2_ref, b2_ref,
                    oa_ref, op_ref, on_ref):
    b = a_ref.shape[0]
    # Stack the three members in VMEM so both matmuls run with M = 3*batch
    # (better MXU fill than three M=batch matmuls; no HBM concat/split).
    x = jnp.concatenate([a_ref[...], p_ref[...], n_ref[...]], axis=0)
    y = _mlp(x, w1_ref[...], b1_ref[...], w2_ref[...], b2_ref[...])
    oa_ref[...] = y[0 * b:1 * b].astype(oa_ref.dtype)
    op_ref[...] = y[1 * b:2 * b].astype(op_ref.dtype)
    on_ref[...] = y[2 * b:3 * b].astype(on_ref.dtype)


def _embed_kernel(x_ref, w1_ref, b1_ref, w2_ref, b2_ref, o_ref):
    o_ref[...] = _mlp(x_ref[...], w1_ref[...], b1_ref[...],
                      w2_ref[...], b2_ref[...]).astype(o_ref.dtype)


# ----------------------------------------------------------------------------
# Wrappers
# ----------------------------------------------------------------------------
_VMEM_SPEC = pl.BlockSpec(memory_space=pltpu.MemorySpace.VMEM)


def _vmem_limit_bytes(n_rows, in_features, hidden, emb_dim):
    """Explicit scoped-VMEM budget: inputs + bf16 weights + f32 biases +
    outputs + f32 intermediates, with headroom, clamped to v7x's 64 MiB."""
    est = (n_rows * in_features * 4                 # f32 activations
           + in_features * hidden * 2               # bf16 W1
           + hidden * emb_dim * 2                   # bf16 W2
           + (hidden + emb_dim) * 4                 # f32 biases
           + n_rows * hidden * 4                    # f32 hidden intermediate
           + 2 * n_rows * emb_dim * 4)              # f32 y + outputs
    return int(min(max(4 * est, 8 * 2**20), 64 * 2**20))


def _prep_weights(params):
    w1, b1, w2, b2 = params
    # Weights in bf16 (halves weight HBM/VMEM traffic; MXU-native rate).
    return w1.astype(jnp.bfloat16), b1, w2.astype(jnp.bfloat16), b2


def triplet_net_forward(anchor, positive, negative, params):
    """TripletNet.forward: shared network applied to anchor/positive/negative.

    Single grid-less pallas_call; three inputs and three outputs go straight
    through as separate refs (no HBM concat/split).
    """
    w1b, b1, w2b, b2 = _prep_weights(params)
    batch, in_features = anchor.shape
    hidden = w1b.shape[1]
    emb_dim = w2b.shape[1]
    out_sds = jax.ShapeDtypeStruct((batch, emb_dim), anchor.dtype)

    a, p, n = pl.pallas_call(
        _triplet_kernel,
        out_shape=(out_sds, out_sds, out_sds),
        in_specs=[_VMEM_SPEC] * 7,
        out_specs=(_VMEM_SPEC, _VMEM_SPEC, _VMEM_SPEC),
        compiler_params=pltpu.CompilerParams(
            vmem_limit_bytes=_vmem_limit_bytes(
                3 * batch, in_features, hidden, emb_dim)),
    )(anchor, positive, negative, w1b, b1, w2b, b2)
    return a, p, n


def embed(x, params):
    """TripletNet.embed: run the wrapped network on a single input batch."""
    w1b, b1, w2b, b2 = _prep_weights(params)
    rows, in_features = x.shape
    hidden = w1b.shape[1]
    emb_dim = w2b.shape[1]

    return pl.pallas_call(
        _embed_kernel,
        out_shape=jax.ShapeDtypeStruct((rows, emb_dim), x.dtype),
        in_specs=[_VMEM_SPEC] * 5,
        out_specs=_VMEM_SPEC,
        compiler_params=pltpu.CompilerParams(
            vmem_limit_bytes=_vmem_limit_bytes(
                rows, in_features, hidden, emb_dim)),
    )(x, w1b, b1, w2b, b2)


def init_params(key, in_features, hidden, emb_dim):
    k1, k2, k3, k4 = jax.random.split(key, 4)
    w1 = jax.random.normal(k1, (in_features, hidden), jnp.float32) * 0.05
    b1 = jax.random.normal(k2, (1, hidden), jnp.float32) * 0.01
    w2 = jax.random.normal(k3, (hidden, emb_dim), jnp.float32) * 0.05
    b2 = jax.random.normal(k4, (1, emb_dim), jnp.float32) * 0.01
    return w1, b1, w2, b2


# ----------------------------------------------------------------------------
# Demo / self-test
# ----------------------------------------------------------------------------
if __name__ == "__main__":
    # Lane-dense sizes: in/hidden/emb multiples of 128, batch multiple of 8
    # (nice for layout, though no longer required for correctness).
    batch, in_features, hidden, emb_dim = 8, 128, 128, 128

    key = jax.random.PRNGKey(0)
    kp, ka, kpos, kneg = jax.random.split(key, 4)

    params = init_params(kp, in_features, hidden, emb_dim)
    anchor = jax.random.normal(ka, (batch, in_features), jnp.float32)
    positive = jax.random.normal(kpos, (batch, in_features), jnp.float32)
    negative = jax.random.normal(kneg, (batch, in_features), jnp.float32)

    fwd = jax.jit(lambda a, p, n: triplet_net_forward(a, p, n, params))
    a, p, n = fwd(anchor, positive, negative)
    jax.block_until_ready((a, p, n))

    # References.
    w1, b1, w2, b2 = params

    def ref_embed_bf16(x):   # same bf16-operand / f32-accumulate recipe
        h = jnp.dot(x.astype(jnp.bfloat16), w1.astype(jnp.bfloat16),
                    preferred_element_type=jnp.float32)
        h = jnp.maximum(h + b1, 0.0)
        y = jnp.dot(h.astype(jnp.bfloat16), w2.astype(jnp.bfloat16),
                    preferred_element_type=jnp.float32)
        return y + b2

    def ref_embed_f32(x):    # pure f32 reference (looser tolerance)
        h = jnp.maximum(x @ w1 + b1, 0.0)
        return h @ w2 + b2

    ref_b = (ref_embed_bf16(anchor), ref_embed_bf16(positive),
             ref_embed_bf16(negative))
    ref_f = (ref_embed_f32(anchor), ref_embed_f32(positive),
             ref_embed_f32(negative))

    for got, want_b, want_f in zip((a, p, n), ref_b, ref_f):
        assert got.shape == (batch, emb_dim)
        assert got.dtype == jnp.float32
        assert jnp.allclose(got, want_b, atol=2e-2, rtol=2e-2)
        assert jnp.allclose(got, want_f, atol=5e-2, rtol=5e-2)

    # Also exercise the standalone embed() path.
    e = jax.jit(lambda x: embed(x, params))(anchor)
    jax.block_until_ready(e)
    assert jnp.allclose(e, ref_b[0], atol=2e-2, rtol=2e-2)

    print("KERNEL_OK")
</pallas_src>

<mosaic_0001>
module attributes {stable_mosaic.version = 11 : i64} {
  func.func @_triplet_kernel(%arg0: memref<8x128xf32, #tpu.memory_space<vmem>>, %arg1: memref<8x128xf32, #tpu.memory_space<vmem>>, %arg2: memref<8x128xf32, #tpu.memory_space<vmem>>, %arg3: memref<128x128xbf16, #tpu.memory_space<vmem>>, %arg4: memref<1x128xf32, #tpu.memory_space<vmem>>, %arg5: memref<128x128xbf16, #tpu.memory_space<vmem>>, %arg6: memref<1x128xf32, #tpu.memory_space<vmem>>, %arg7: memref<8x128xf32, #tpu.memory_space<vmem>>, %arg8: memref<8x128xf32, #tpu.memory_space<vmem>>, %arg9: memref<8x128xf32, #tpu.memory_space<vmem>>) attributes {dimension_semantics = [], scalar_prefetch = 0 : i64, scratch_operands = 0 : i64, tpu.core_type = #tpu.core_type<tc>} {
    %c0 = arith.constant 0 : index
    %c0_0 = arith.constant 0 : index
    %0 = vector.load %arg0[%c0, %c0_0] : memref<8x128xf32, #tpu.memory_space<vmem>>, vector<8x128xf32>
    %c0_1 = arith.constant 0 : index
    %c0_2 = arith.constant 0 : index
    %1 = vector.load %arg1[%c0_1, %c0_2] : memref<8x128xf32, #tpu.memory_space<vmem>>, vector<8x128xf32>
    %c0_3 = arith.constant 0 : index
    %c0_4 = arith.constant 0 : index
    %2 = vector.load %arg2[%c0_3, %c0_4] : memref<8x128xf32, #tpu.memory_space<vmem>>, vector<8x128xf32>
    %3 = tpu.concatenate %0, %1, %2 in 0 : vector<8x128xf32>, vector<8x128xf32>, vector<8x128xf32> -> vector<24x128xf32>
    %c0_5 = arith.constant 0 : index
    %c0_6 = arith.constant 0 : index
    %4 = vector.load %arg3[%c0_5, %c0_6] : memref<128x128xbf16, #tpu.memory_space<vmem>>, vector<128x128xbf16>
    %c0_7 = arith.constant 0 : index
    %c0_8 = arith.constant 0 : index
    %5 = vector.load %arg4[%c0_7, %c0_8] : memref<1x128xf32, #tpu.memory_space<vmem>>, vector<1x128xf32>
    %c0_9 = arith.constant 0 : index
    %c0_10 = arith.constant 0 : index
    %6 = vector.load %arg5[%c0_9, %c0_10] : memref<128x128xbf16, #tpu.memory_space<vmem>>, vector<128x128xbf16>
    %c0_11 = arith.constant 0 : index
    %c0_12 = arith.constant 0 : index
    %7 = vector.load %arg6[%c0_11, %c0_12] : memref<1x128xf32, #tpu.memory_space<vmem>>, vector<1x128xf32>
    %8 = arith.truncf %3 : vector<24x128xf32> to vector<24x128xbf16>
    %cst = arith.constant dense<0.000000e+00> : vector<24x128xf32>
    %9 = tpu.matmul %8, %4, %cst {dimension_numbers = #tpu.dot_dimension_numbers<[1], [0], [0], [1], [0, 0, 1, 1], [], []>} : vector<24x128xbf16>, vector<128x128xbf16>, vector<24x128xf32> -> vector<24x128xf32>
    %10 = vector.broadcast %5 : vector<1x128xf32> to vector<24x128xf32>
    %11 = arith.addf %9, %10 : vector<24x128xf32>
    %cst_13 = arith.constant 0.000000e+00 : f32
    %12 = vector.broadcast %cst_13 : f32 to vector<24x128xf32>
    %13 = arith.maximumf %11, %12 : vector<24x128xf32>
    %14 = arith.truncf %13 : vector<24x128xf32> to vector<24x128xbf16>
    %cst_14 = arith.constant dense<0.000000e+00> : vector<24x128xf32>
    %15 = tpu.matmul %14, %6, %cst_14 {dimension_numbers = #tpu.dot_dimension_numbers<[1], [0], [0], [1], [0, 0, 1, 1], [], []>} : vector<24x128xbf16>, vector<128x128xbf16>, vector<24x128xf32> -> vector<24x128xf32>
    %16 = vector.broadcast %7 : vector<1x128xf32> to vector<24x128xf32>
    %17 = arith.addf %15, %16 : vector<24x128xf32>
    %18 = vector.extract_strided_slice %17 {offsets = [0, 0], sizes = [8, 128], strides = [1, 1]} : vector<24x128xf32> to vector<8x128xf32>
    %c0_15 = arith.constant 0 : index
    %c0_16 = arith.constant 0 : index
    %19 = vector.load %arg7[%c0_15, %c0_16] : memref<8x128xf32, #tpu.memory_space<vmem>>, vector<8x128xf32>
    tpu.vector_store %arg7[%c0_15, %c0_16], %18 {strides = array<i32>} : memref<8x128xf32, #tpu.memory_space<vmem>>, vector<8x128xf32>,
    %20 = vector.extract_strided_slice %17 {offsets = [8, 0], sizes = [8, 128], strides = [1, 1]} : vector<24x128xf32> to vector<8x128xf32>
    %c0_17 = arith.constant 0 : index
    %c0_18 = arith.constant 0 : index
    %21 = vector.load %arg8[%c0_17, %c0_18] : memref<8x128xf32, #tpu.memory_space<vmem>>, vector<8x128xf32>
    tpu.vector_store %arg8[%c0_17, %c0_18], %20 {strides = array<i32>} : memref<8x128xf32, #tpu.memory_space<vmem>>, vector<8x128xf32>,
    %22 = vector.extract_strided_slice %17 {offsets = [16, 0], sizes = [8, 128], strides = [1, 1]} : vector<24x128xf32> to vector<8x128xf32>
    %c0_19 = arith.constant 0 : index
    %c0_20 = arith.constant 0 : index
    %23 = vector.load %arg9[%c0_19, %c0_20] : memref<8x128xf32, #tpu.memory_space<vmem>>, vector<8x128xf32>
    tpu.vector_store %arg9[%c0_19, %c0_20], %22 {strides = array<i32>} : memref<8x128xf32, #tpu.memory_space<vmem>>, vector<8x128xf32>,
    return
  }
}

</mosaic_0001>

<llo_original>
// kernel: _lambda_.1
$region0: #{_lambda_.1}
  #allocation0 [shape = 'u32[]', space=smem, size = 0x4, offset = 0x4, fixed_abs, tag = 'smem constant byte address 0x4 - core index']
  #allocation1 [shape = 'u32[72,128]{1,0:T(1,128)}', space=vmem, size = 0x9000, scoped, tag = 'internal scratch']
  %s0 = inlined_call_operand.hbm [shape: f32[8,128], index: 0, kind: input, shape index: {}]
  %s1 = inlined_call_operand.hbm [shape: f32[8,128], index: 1, kind: input, shape index: {}]
  %s2 = inlined_call_operand.hbm [shape: f32[8,128], index: 2, kind: input, shape index: {}]
  %s3 = inlined_call_operand.hbm [shape: bf16[128,128], index: 3, kind: input, shape index: {}]
  %s4 = inlined_call_operand.vmem [shape: f32[1,128], index: 4, kind: input, shape index: {}]
  %s5 = inlined_call_operand.hbm [shape: bf16[128,128], index: 5, kind: input, shape index: {}]
  %s6 = inlined_call_operand.vmem [shape: f32[1,128], index: 6, kind: input, shape index: {}]
  %s7 = inlined_call_operand.hbm [shape: f32[8,128], index: 7, kind: output, shape index: {0}]
  %s8 = inlined_call_operand.hbm [shape: f32[8,128], index: 8, kind: output, shape index: {1}]
  %s9 = inlined_call_operand.hbm [shape: f32[8,128], index: 9, kind: output, shape index: {2}]
  %10 = xla_tuple %s7, %s8, %s9
  %s11 = sld [smem:[#allocation0]]
  $region74: #{_lambda_.1} parent=0
    _
  %s13 = ssub.s32 1, %s11
  %s14 = scalar_select 0, %s13, %s11
  $region1: #{_lambda_.1} parent=0
    #allocation2 [shape = 'u8[4096]{0}', space=vmem, size = 0x1000, scoped, tag = 'input window, operand 0, single buffered']
    #allocation3 [shape = 's32[1]{0}', space=sflag, size = 0x4, scoped, tag = 'scoped memory for _lambda_.1']
    #allocation4 [shape = 's32[1]{0}', space=sflag, size = 0x4, scoped, tag = 'scoped memory for _lambda_.1']
    #allocation5 [shape = 'u8[4096]{0}', space=vmem, size = 0x1000, scoped, tag = 'input window, operand 1, single buffered']
    #allocation6 [shape = 's32[1]{0}', space=sflag, size = 0x4, scoped, tag = 'scoped memory for _lambda_.1']
    #allocation7 [shape = 'u8[4096]{0}', space=vmem, size = 0x1000, scoped, tag = 'input window, operand 2, single buffered']
    #allocation8 [shape = 'u8[32768]{0}', space=vmem, size = 0x8000, scoped, tag = 'input window, operand 3, single buffered']
    #allocation9 [shape = 's32[1]{0}', space=sflag, size = 0x4, scoped, tag = 'scoped memory for _lambda_.1']
    #allocation10 [shape = 'u8[32768]{0}', space=vmem, size = 0x8000, scoped, tag = 'input window, operand 5, single buffered']
    #allocation11 [shape = 'u8[4096]{0}', space=vmem, size = 0x1000, scoped, tag = 'output window, operand 0, single buffered']
    #allocation12 [shape = 'u8[4096]{0}', space=vmem, size = 0x1000, scoped, tag = 'output window, operand 1, single buffered']
    #allocation13 [shape = 's32[1]{0}', space=sflag, size = 0x4, scoped, tag = 'scoped memory for _lambda_.1']
    #allocation14 [shape = 'u8[4096]{0}', space=vmem, size = 0x1000, scoped, tag = 'output window, operand 2, single buffered']
    %15 = vsyncpa [#allocation3], 0
    %16 = vsyncpa [#allocation6], 0
    %17 = vsyncpa [#allocation9], 0
    %18 = vsyncpa [#allocation4], 0
    %19 = vsyncpa [#allocation13], 0
    // Predicated region
    $region2: #{_lambda_.1} parent=1 // pred_check
      _
    $region3: #{_lambda_.1} parent=1 // pred_check_branch
      %21 = sbr.rel (0) target = $region5
    $region4: #{_lambda_.1} parent=1 // pred_region
      %23 = vsyncadd [#allocation3], 0
      %s25 = sshll.u32 %s0, 4
      %s26 = int_to_ptr.hbm [resolvable:$true] %s25
      %s27 = sshll.u32 [#allocation2], 4
      %s28 = int_to_ptr.vmem [resolvable:$true] %s27
      %30 = dma.hbm_to_vmem [thread:$0]  %s26, 128, %s28, [#allocation3]
    $region5: #{_lambda_.1} parent=1 // pred_fallthru
      _
    // Predicated region
    $region6: #{_lambda_.1} parent=1 // pred_check
      _
    $region7: #{_lambda_.1} parent=1 // pred_check_branch
      %32 = sbr.rel (0) target = $region9
    $region8: #{_lambda_.1} parent=1 // pred_region
      %34 = vsyncadd [#allocation6], 0
      %s36 = sshll.u32 %s1, 4
      %s37 = int_to_ptr.hbm [resolvable:$true] %s36
      %s38 = sshll.u32 [#allocation5], 4
      %s39 = int_to_ptr.vmem [resolvable:$true] %s38
      %41 = dma.hbm_to_vmem [thread:$0]  %s37, 128, %s39, [#allocation6]
    $region9: #{_lambda_.1} parent=1 // pred_fallthru
      _
    // Predicated region
    $region10: #{_lambda_.1} parent=1 // pred_check
      _
    $region11: #{_lambda_.1} parent=1 // pred_check_branch
      %43 = sbr.rel (0) target = $region13
    $region12: #{_lambda_.1} parent=1 // pred_region
      %45 = vsyncadd [#allocation6], 0
      %s47 = sshll.u32 %s2, 4
      %s48 = int_to_ptr.hbm [resolvable:$true] %s47
      %s49 = sshll.u32 [#allocation7], 4
      %s50 = int_to_ptr.vmem [resolvable:$true] %s49
      %52 = dma.hbm_to_vmem [thread:$0]  %s48, 128, %s50, [#allocation6]
    $region13: #{_lambda_.1} parent=1 // pred_fallthru
      _
    // Predicated region
    $region14: #{_lambda_.1} parent=1 // pred_check
      _
    $region15: #{_lambda_.1} parent=1 // pred_check_branch
      %54 = sbr.rel (0) target = $region17
    $region16: #{_lambda_.1} parent=1 // pred_region
      %56 = vsyncadd [#allocation9], 0
      %s57 = sshll.u32 %s3, 4
      %s58 = int_to_ptr.hbm [resolvable:$true] %s57
      %s59 = sshll.u32 [#allocation8], 4
      %s60 = int_to_ptr.vmem [resolvable:$true] %s59
      %65 = dma.hbm_to_vmem [thread:$0]  %s58, 1024, %s60, [#allocation9], 64, 64, 4
    $region17: #{_lambda_.1} parent=1 // pred_fallthru
      _
    // Predicated region
    $region18: #{_lambda_.1} parent=1 // pred_check
      _
    $region19: #{_lambda_.1} parent=1 // pred_check_branch
      %67 = sbr.rel (0) target = $region21
    $region20: #{_lambda_.1} parent=1 // pred_region
      _
    $region21: #{_lambda_.1} parent=1 // pred_fallthru
      _
    // Predicated region
    $region22: #{_lambda_.1} parent=1 // pred_check
      _
    $region23: #{_lambda_.1} parent=1 // pred_check_branch
      %69 = sbr.rel (0) target = $region25
    $region24: #{_lambda_.1} parent=1 // pred_region
      %71 = vsyncadd [#allocation9], 0
      %s72 = sshll.u32 %s5, 4
      %s73 = int_to_ptr.hbm [resolvable:$true] %s72
      %s74 = sshll.u32 [#allocation10], 4
      %s75 = int_to_ptr.vmem [resolvable:$true] %s74
      %80 = dma.hbm_to_vmem [thread:$0]  %s73, 1024, %s75, [#allocation9], 64, 64, 4
    $region25: #{_lambda_.1} parent=1 // pred_fallthru
      _
    // Predicated region
    $region26: #{_lambda_.1} parent=1 // pred_check
      _
    $region27: #{_lambda_.1} parent=1 // pred_check_branch
      %82 = sbr.rel (0) target = $region29
    $region28: #{_lambda_.1} parent=1 // pred_region
      _
    $region29: #{_lambda_.1} parent=1 // pred_fallthru
      _
    // Predicated region
    $region30: #{_lambda_.1} parent=1 // pred_check
      _
    $region31: #{_lambda_.1} parent=1 // pred_check_branch
      %84 = sbr.rel (0) target = $region33
    $region32: #{_lambda_.1} parent=1 // pred_region
      %86 = dma.done [#allocation3], 128
    $region33: #{_lambda_.1} parent=1 // pred_fallthru
      _
    // Predicated region
    $region34: #{_lambda_.1} parent=1 // pred_check
      _
    $region35: #{_lambda_.1} parent=1 // pred_check_branch
      %88 = sbr.rel (0) target = $region37
    $region36: #{_lambda_.1} parent=1 // pred_region
      %90 = dma.done [#allocation6], 128
    $region37: #{_lambda_.1} parent=1 // pred_fallthru
      _
    // Predicated region
    $region38: #{_lambda_.1} parent=1 // pred_check
      _
    $region39: #{_lambda_.1} parent=1 // pred_check_branch
      %92 = sbr.rel (0) target = $region41
    $region40: #{_lambda_.1} parent=1 // pred_region
      %94 = dma.done [#allocation6], 128
    $region41: #{_lambda_.1} parent=1 // pred_fallthru
      _
    // Predicated region
    $region42: #{_lambda_.1} parent=1 // pred_check
      _
    $region43: #{_lambda_.1} parent=1 // pred_check_branch
      %96 = sbr.rel (0) target = $region45
    $region44: #{_lambda_.1} parent=1 // pred_region
      %98 = dma.done [#allocation9], 1024
    $region45: #{_lambda_.1} parent=1 // pred_fallthru
      _
    // Predicated region
    $region46: #{_lambda_.1} parent=1 // pred_check
      _
    $region47: #{_lambda_.1} parent=1 // pred_check_branch
      %100 = sbr.rel (0) target = $region49
    $region48: #{_lambda_.1} parent=1 // pred_region
      %102 = dma.done [#allocation9], 1024
    $region49: #{_lambda_.1} parent=1 // pred_fallthru
      _
    %v103 = vld [vmem:[#allocation2] sm:$0xff]
    %v104 = vld [vmem:[#allocation5] sm:$0xff]
    %v105 = vld [vmem:[#allocation7] sm:$0xff]
    %v106 = vld [vmem:[#allocation8] sm:$0xf]
    %v107 = vld [vmem:[#allocation8 + $0x4] sm:$0xf]
    %v108 = vld [vmem:[#allocation8 + $0x8] sm:$0xf]
    %v109 = vld [vmem:[#allocation8 + $0xc] sm:$0xf]
    %v110 = vld [vmem:[#allocation8 + $0x10] sm:$0xf]
    %v111 = vld [vmem:[#allocation8 + $0x14] sm:$0xf]
    %v112 = vld [vmem:[#allocation8 + $0x18] sm:$0xf]
    %v113 = vld [vmem:[#allocation8 + $0x1c] sm:$0xf]
    %v114 = vld [vmem:[#allocation8 + $0x20] sm:$0xf]
    %v115 = vld [vmem:[#allocation8 + $0x24] sm:$0xf]
    %v116 = vld [vmem:[#allocation8 + $0x28] sm:$0xf]
    %v117 = vld [vmem:[#allocation8 + $0x2c] sm:$0xf]
    %v118 = vld [vmem:[#allocation8 + $0x30] sm:$0xf]
    %v119 = vld [vmem:[#allocation8 + $0x34] sm:$0xf]
    %v120 = vld [vmem:[#allocation8 + $0x38] sm:$0xf]
    %v121 = vld [vmem:[#allocation8 + $0x3c] sm:$0xf]
    %v122 = vld [vmem:[%s4] sm:$0x1]
    %v123 = vld [vmem:[#allocation10] sm:$0xf]
    %v124 = vld [vmem:[#allocation10 + $0x4] sm:$0xf]
    %v125 = vld [vmem:[#allocation10 + $0x8] sm:$0xf]
    %v126 = vld [vmem:[#allocation10 + $0xc] sm:$0xf]
    %v127 = vld [vmem:[#allocation10 + $0x10] sm:$0xf]
    %v128 = vld [vmem:[#allocation10 + $0x14] sm:$0xf]
    %v129 = vld [vmem:[#allocation10 + $0x18] sm:$0xf]
    %v130 = vld [vmem:[#allocation10 + $0x1c] sm:$0xf]
    %v131 = vld [vmem:[#allocation10 + $0x20] sm:$0xf]
    %v132 = vld [vmem:[#allocation10 + $0x24] sm:$0xf]
    %v133 = vld [vmem:[#allocation10 + $0x28] sm:$0xf]
    %v134 = vld [vmem:[#allocation10 + $0x2c] sm:$0xf]
    %v135 = vld [vmem:[#allocation10 + $0x30] sm:$0xf]
    %v136 = vld [vmem:[#allocation10 + $0x34] sm:$0xf]
    %v137 = vld [vmem:[#allocation10 + $0x38] sm:$0xf]
    %v138 = vld [vmem:[#allocation10 + $0x3c] sm:$0xf]
    %v139 = vld [vmem:[%s6] sm:$0x1]
    %v140 = vpack.c.bf16 %v104, %v103
    %v141 = vpack.c.bf16 %v105, %v105
    %v143 = vperm.slane %v122, 0
    %v161 = vunpack.c.l.b16 %v106
    %v162 = vunpack.c.l.b16 %v107
    %v163 = vunpack.c.l.b16 %v108
    %v164 = vunpack.c.l.b16 %v109
    %v165 = vunpack.c.l.b16 %v110
    %v166 = vunpack.c.l.b16 %v111
    %v167 = vunpack.c.l.b16 %v112
    %v168 = vunpack.c.l.b16 %v113
    %v169 = vunpack.c.l.b16 %v114
    %v170 = vunpack.c.l.b16 %v115
    %v171 = vunpack.c.l.b16 %v116
    %v172 = vunpack.c.l.b16 %v117
    %v173 = vunpack.c.l.b16 %v118
    %v174 = vunpack.c.l.b16 %v119
    %v175 = vunpack.c.l.b16 %v120
    %v176 = vunpack.c.l.b16 %v121
    %v177 = vpack.c.b16 %v162, %v161
    %v178 = vpack.c.b16 %v164, %v163
    %v179 = vpack.c.b16 %v166, %v165
    %v180 = vpack.c.b16 %v168, %v167
    %v181 = vpack.c.b16 %v170, %v169
    %v182 = vpack.c.b16 %v172, %v171
    %v183 = vpack.c.b16 %v174, %v173
    %v184 = vpack.c.b16 %v176, %v175
    %193 = vmatpush.bf16.msra.mxu0 %v184
    %194 = vmatpush.bf16.msra.mxu0 %v183
    %195 = vmatpush.bf16.msra.mxu0 %v182
    %196 = vmatpush.bf16.msra.mxu0 %v181
    %197 = vmatpush.bf16.msra.mxu0 %v180
    %198 = vmatpush.bf16.msra.mxu0 %v179
    %199 = vmatpush.bf16.msra.mxu0 %v178
    %200 = vmatpush.bf16.msra.mxu0 %v177
    %201 = vmatmul.bf16.gmra.mxu0 %v140
    %v202 = vpop.f32.mrf.mxu0
    %v203 = vadd.f32 %v143, %v202
    %v204 = vpop.f32.mrf.mxu0
    %v205 = vadd.f32 %v143, %v204
    %206 = vmatmul.bf16.gmra.mxu0 %v141
    %v207 = vpop.f32.mrf.mxu0
    %v208 = vadd.f32 %v143, %v207
    %v209 = vpop.f32.mrf.mxu0
    %210 = vdwg.mxu0
    %v211 = vmax.f32 %v203, 0.0
    %v212 = vmax.f32 %v205, 0.0
    %v213 = vmax.f32 %v208, 0.0
    %v214 = vpack.c.bf16 %v212, %v211
    %v215 = vpack.c.bf16 %v213, %v213
    %v217 = vperm.slane %v139, 0
    %v235 = vunpack.c.l.b16 %v123
    %v236 = vunpack.c.l.b16 %v124
    %v237 = vunpack.c.l.b16 %v125
    %v238 = vunpack.c.l.b16 %v126
    %v239 = vunpack.c.l.b16 %v127
    %v240 = vunpack.c.l.b16 %v128
    %v241 = vunpack.c.l.b16 %v129
    %v242 = vunpack.c.l.b16 %v130
    %v243 = vunpack.c.l.b16 %v131
    %v244 = vunpack.c.l.b16 %v132
    %v245 = vunpack.c.l.b16 %v133
    %v246 = vunpack.c.l.b16 %v134
    %v247 = vunpack.c.l.b16 %v135
    %v248 = vunpack.c.l.b16 %v136
    %v249 = vunpack.c.l.b16 %v137
    %v250 = vunpack.c.l.b16 %v138
    %v251 = vpack.c.b16 %v236, %v235
    %v252 = vpack.c.b16 %v238, %v237
    %v253 = vpack.c.b16 %v240, %v239
    %v254 = vpack.c.b16 %v242, %v241
    %v255 = vpack.c.b16 %v244, %v243
    %v256 = vpack.c.b16 %v246, %v245
    %v257 = vpack.c.b16 %v248, %v247
    %v258 = vpack.c.b16 %v250, %v249
    %267 = vmatpush.bf16.msra.mxu0 %v258
    %268 = vmatpush.bf16.msra.mxu0 %v257
    %269 = vmatpush.bf16.msra.mxu0 %v256
    %270 = vmatpush.bf16.msra.mxu0 %v255
    %271 = vmatpush.bf16.msra.mxu0 %v254
    %272 = vmatpush.bf16.msra.mxu0 %v253
    %273 = vmatpush.bf16.msra.mxu0 %v252
    %274 = vmatpush.bf16.msra.mxu0 %v251
    %275 = vmatmul.bf16.gmra.mxu0 %v214
    %v276 = vpop.f32.mrf.mxu0
    %v277 = vadd.f32 %v217, %v276
    %v278 = vpop.f32.mrf.mxu0
    %v279 = vadd.f32 %v217, %v278
    %280 = vmatmul.bf16.gmra.mxu0 %v215
    %v281 = vpop.f32.mrf.mxu0
    %v282 = vadd.f32 %v217, %v281
    %v283 = vpop.f32.mrf.mxu0
    %284 = vdwg.mxu0
    %285 = vst [vmem:[#allocation11] sm:$0xff] %v277
    %286 = vst [vmem:[#allocation12] sm:$0xff] %v279
    %287 = vst [vmem:[#allocation14] sm:$0xff] %v282
    // Predicated region
    $region50: #{_lambda_.1} parent=1 // pred_check
      _
    $region51: #{_lambda_.1} parent=1 // pred_check_branch
      %289 = sbr.rel (0) target = $region53
    $region52: #{_lambda_.1} parent=1 // pred_region
      %291 = vsyncadd [#allocation4], 0
      %s293 = sshll.u32 [#allocation11], 4
      %s294 = int_to_ptr.vmem [resolvable:$true] %s293
      %s295 = sshll.u32 %s7, 4
      %s296 = int_to_ptr.hbm [resolvable:$true] %s295
      %298 = dma.vmem_to_hbm [thread:$0]  %s294, 128, %s296, [#allocation4]
    $region53: #{_lambda_.1} parent=1 // pred_fallthru
      _
    // Predicated region
    $region54: #{_lambda_.1} parent=1 // pred_check
      _
    $region55: #{_lambda_.1} parent=1 // pred_check_branch
      %300 = sbr.rel (0) target = $region57
    $region56: #{_lambda_.1} parent=1 // pred_region
      %302 = vsyncadd [#allocation13], 0
      %s304 = sshll.u32 [#allocation12], 4
      %s305 = int_to_ptr.vmem [resolvable:$true] %s304
      %s306 = sshll.u32 %s8, 4
      %s307 = int_to_ptr.hbm [resolvable:$true] %s306
      %309 = dma.vmem_to_hbm [thread:$0]  %s305, 128, %s307, [#allocation13]
    $region57: #{_lambda_.1} parent=1 // pred_fallthru
      _
    // Predicated region
    $region58: #{_lambda_.1} parent=1 // pred_check
      _
    $region59: #{_lambda_.1} parent=1 // pred_check_branch
      %311 = sbr.rel (0) target = $region61
    $region60: #{_lambda_.1} parent=1 // pred_region
      %313 = vsyncadd [#allocation13], 0
      %s315 = sshll.u32 [#allocation14], 4
      %s316 = int_to_ptr.vmem [resolvable:$true] %s315
      %s317 = sshll.u32 %s9, 4
      %s318 = int_to_ptr.hbm [resolvable:$true] %s317
      %320 = dma.vmem_to_hbm [thread:$0]  %s316, 128, %s318, [#allocation13]
    $region61: #{_lambda_.1} parent=1 // pred_fallthru
      _
    // Predicated region
    $region62: #{_lambda_.1} parent=1 // pred_check
      _
    $region63: #{_lambda_.1} parent=1 // pred_check_branch
      %322 = sbr.rel (0) target = $region65
    $region64: #{_lambda_.1} parent=1 // pred_region
      %324 = dma.done [#allocation4], 128
    $region65: #{_lambda_.1} parent=1 // pred_fallthru
      _
    // Predicated region
    $region66: #{_lambda_.1} parent=1 // pred_check
      _
    $region67: #{_lambda_.1} parent=1 // pred_check_branch
      %326 = sbr.rel (0) target = $region69
    $region68: #{_lambda_.1} parent=1 // pred_region
      %328 = dma.done [#allocation13], 128
    $region69: #{_lambda_.1} parent=1 // pred_fallthru
      _
    // Predicated region
    $region70: #{_lambda_.1} parent=1 // pred_check
      _
    $region71: #{_lambda_.1} parent=1 // pred_check_branch
      %330 = sbr.rel (0) target = $region73
    $region72: #{_lambda_.1} parent=1 // pred_region
      %332 = dma.done [#allocation13], 128
    $region73: #{_lambda_.1} parent=1 // pred_fallthru
      _
    %333 = vsyncpa [#allocation3], 1
    %334 = vsyncpa [#allocation6], 1
    %335 = vsyncpa [#allocation9], 1
    %336 = vsyncpa [#allocation4], 1
    %337 = vsyncpa [#allocation13], 1

</llo_original>
